<compile_context>
chip_gen: v7x
topology: tpu7x:2x2x1
jax: 0.10.0
libtpu: 0.0.40
codegen_flags: <defaults>
</compile_context>

<pallas_src>
import functools

import jax
import jax.numpy as jnp
from jax.experimental import pallas as pl
from jax.experimental.pallas import tpu as pltpu


def _round_up(x, m):
    return ((x + m - 1) // m) * m


def _vocab_pad(v):
    """Pad V so that a large lane tile (tv up to 2048) divides the padded V."""
    return _round_up(v, 2048) if v >= 4096 else _round_up(v, 128)


def _vmem_capacity_bytes():
    """Physical VMEM per TensorCore; hardware query with conservative fallback."""
    try:
        cap = getattr(pltpu.get_tpu_info(), "vmem_capacity_bytes", None)
        if cap:
            return int(cap)
    except Exception:
        pass
    try:
        kind = jax.devices()[0].device_kind.lower()
        if ("v4" in kind) or ("v5" in kind) or ("v6" in kind):
            return 128 * 1024 * 1024
    except Exception:
        pass
    return 64 * 1024 * 1024  # v7x-safe default


def _tile_vmem_bytes(tm, tv, H):
    """Approximate VMEM footprint: double-buffered pipeline slabs + f32 logits."""
    w_buf = 2 * H * tv * 2          # bf16 weight tile, double buffered
    h_buf = 2 * tm * H * 2          # bf16 hidden tile, double buffered
    lab_buf = 2 * tm * 4
    out_buf = 2 * tm * 4
    lane_buf = 2 * tv * 4
    logits = tm * tv * 4            # f32 matmul result
    scratch = 3 * tm * 4
    return w_buf + h_buf + lab_buf + out_buf + lane_buf + logits + scratch


def _choose_tiles(N, H, v_pad, vmem_budget):
    """Pick (tm, tv). tm drives arithmetic intensity (== flops per weight byte),
    tv amortizes per-step overhead; both are capped by the VMEM budget."""
    n16 = _round_up(max(N, 1), 16)
    tv_cands = [t for t in (2048, 1024, 512, 256, 128)
                if t <= v_pad and v_pad % t == 0] or [v_pad]
    tm_cands = (1024, 768, 512, 384, 256, 128, 64, 32, 16)
    for min_tv in (512, 128):
        for tm in tm_cands:
            tm_eff = min(tm, n16)
            for tv in tv_cands:
                if tv < min_tv:
                    continue
                if _tile_vmem_bytes(tm_eff, tv, H) <= vmem_budget:
                    # Compute-bound regime: keep >= 2 row tiles so the "parallel"
                    # row axis can shard across TensorCores (v7x megacore).
                    if n16 >= 1280 and tm_eff >= n16:
                        tm_eff = _round_up((n16 + 1) // 2, 16)
                    return tm_eff, tv
    return 16, tv_cands[-1]


# ----------------------------------------------------------------------------
# Pallas kernel: tiled lm_head matmul + online log-softmax + label gather
# ----------------------------------------------------------------------------
def _make_lm_head_kernel(v_actual, v_pad, tv):
    needs_vocab_mask = v_pad != v_actual

    def kernel(h_ref, w_ref, lab_ref, lane_ref, out_ref, m_sc, l_sc, lab_sc):
        # h_ref:    (TM, H)  bf16   row tile of shifted hidden states
        # w_ref:    (H, TV)  bf16   vocab tile of lm_head weight
        # lab_ref:  (TM, 1)  i32    labels for this row tile
        # lane_ref: (1, TV)  i32    hoisted lane iota (same for every step)
        # out_ref:  (TM, 1)  f32    per-token log-prob (written at last vocab tile)
        # m_sc/l_sc/lab_sc: (TM, 1) f32 running max / running sum / label logit
        j = pl.program_id(1)
        nj = pl.num_programs(1)

        @pl.when(j == 0)
        def _init():
            m_sc[...] = jnp.full_like(m_sc, -jnp.inf)
            l_sc[...] = jnp.zeros_like(l_sc)
            lab_sc[...] = jnp.zeros_like(lab_sc)

        # MXU matmul in bf16 with f32 accumulation.
        logits = jnp.dot(h_ref[...], w_ref[...],
                         preferred_element_type=jnp.float32)          # (TM, TV)

        # Vocab column ids for this tile (scalar offset + hoisted iota).
        col_ids = j * tv + lane_ref[...]                               # (1, TV)

        # Label gather: label falls in exactly one vocab tile; accumulate raw
        # logit.  Padded columns (ids >= V) can never match a real label < V.
        # NOTE: labels >= V or < 0 would silently yield lab_sc == 0.
        labels = lab_ref[...]                                          # (TM, 1)
        lab_sc[...] += jnp.sum(
            jnp.where(col_ids == labels, logits, 0.0), axis=-1, keepdims=True)

        def online_update(lg):
            m_prev = m_sc[...]
            m_new = jnp.maximum(m_prev, jnp.max(lg, axis=-1, keepdims=True))
            alpha = jnp.exp(m_prev - m_new)
            l_sc[...] = alpha * l_sc[...] + jnp.sum(jnp.exp(lg - m_new),
                                                    axis=-1, keepdims=True)
            m_sc[...] = m_new

        if needs_vocab_mask:
            # Only tiles that overlap the padded tail pay for the mask.
            tile_end = (j + 1) * tv

            @pl.when(tile_end <= v_actual)
            def _fast():
                online_update(logits)

            @pl.when(tile_end > v_actual)
            def _masked():
                online_update(jnp.where(col_ids < v_actual, logits, -jnp.inf))
        else:
            online_update(logits)

        @pl.when(j == nj - 1)
        def _finalize():
            out_ref[...] = lab_sc[...] - (m_sc[...] + jnp.log(l_sc[...]))

    return kernel


def lm_head_log_probs(h, w_padded, labels, v_actual):
    """h: (N, H) float; w_padded: (H, V_pad) bf16 (pre-padded, pre-cast);
    labels: (N,) int; returns (N,) f32 log softmax(h @ W)[label]."""
    N, H = h.shape
    v_pad = w_padded.shape[1]

    vmem_phys = _vmem_capacity_bytes()
    tm, tv = _choose_tiles(N, H, v_pad, int(vmem_phys * 0.70))
    vmem_limit = min(int(vmem_phys * 0.80), 100 * 1024 * 1024)

    n_pad = _round_up(N, tm)

    # Only the (small) hidden rows are cast per call; the big weight is already
    # bf16 and lane-padded in params.
    h = h.astype(jnp.bfloat16)
    if n_pad != N:
        h = jnp.pad(h, ((0, n_pad - N), (0, 0)))
        labels = jnp.pad(labels, ((0, n_pad - N),))
    labels2d = labels.reshape(n_pad, 1).astype(jnp.int32)
    lane_ids = jax.lax.broadcasted_iota(jnp.int32, (1, tv), 1)

    grid = (n_pad // tm, v_pad // tv)

    cost = pl.CostEstimate(
        flops=2 * n_pad * H * v_pad,
        transcendentals=n_pad * v_pad,
        bytes_accessed=(n_pad * H * 2                 # hidden (bf16)
                        + grid[0] * H * v_pad * 2     # weight, once per row tile
                        + n_pad * 4 + n_pad * 4),     # labels + output
    )

    out = pl.pallas_call(
        _make_lm_head_kernel(v_actual, v_pad, tv),
        out_shape=jax.ShapeDtypeStruct((n_pad, 1), jnp.float32),
        grid_spec=pltpu.PrefetchScalarGridSpec(
            num_scalar_prefetch=0,
            grid=grid,
            in_specs=[
                pl.BlockSpec((tm, H), lambda i, j: (i, 0)),    # hidden row tile
                pl.BlockSpec((H, tv), lambda i, j: (0, j)),    # weight vocab tile
                pl.BlockSpec((tm, 1), lambda i, j: (i, 0)),    # labels row tile
                pl.BlockSpec((1, tv), lambda i, j: (0, 0)),    # hoisted lane iota
            ],
            out_specs=pl.BlockSpec((tm, 1), lambda i, j: (i, 0)),
            scratch_shapes=[pltpu.VMEM((tm, 1), jnp.float32)] * 3,
        ),
        compiler_params=pltpu.CompilerParams(
            dimension_semantics=("parallel", "arbitrary"),
            vmem_limit_bytes=vmem_limit,
        ),
        cost_estimate=cost,
    )(h, w_padded, labels2d, lane_ids)
    return out[:N, 0]


# ----------------------------------------------------------------------------
# Actor.forward (base path: num_actions given, no entropy / cross-entropy)
# ----------------------------------------------------------------------------
def init_params(key, vocab_size, max_pos, hidden):
    k1, k2, k3 = jax.random.split(key, 3)
    w = jax.random.normal(k3, (hidden, vocab_size), jnp.float32) * 0.02
    v_pad = _vocab_pad(vocab_size)
    # One-time prep: bf16 cast + lane pad of the lm_head weight (NOT per call).
    w_prepped = jnp.pad(w, ((0, 0), (0, v_pad - vocab_size))).astype(jnp.bfloat16)
    return {
        "tok_emb": jax.random.normal(k1, (vocab_size, hidden), jnp.float32) * 0.02,
        "pos_emb": jax.random.normal(k2, (max_pos, hidden), jnp.float32) * 0.02,
        "lm_head": w_prepped,                       # (H, V_pad) bf16
    }


@functools.partial(jax.jit, static_argnames=("num_actions",))
def actor_forward(params, sequences, attention_mask, num_actions):
    """Returns action log-probs, shape (B, num_actions)."""
    B, T = sequences.shape
    if not (0 < num_actions <= T - 1):
        raise ValueError(f"num_actions={num_actions} must be in [1, {T - 1}]")
    vocab_size = params["tok_emb"].shape[0]

    # position_ids = attention_mask.cumsum(-1) - 1 ; masked_fill_(mask==0, 1)
    mask = attention_mask.astype(jnp.int32)
    position_ids = jnp.cumsum(mask, axis=-1) - 1
    position_ids = jnp.where(mask == 0, 1, position_ids)

    # synthetic causal-LM backbone (stand-in for AutoModelForCausalLM):
    hidden = params["tok_emb"][sequences] + params["pos_emb"][position_ids]  # (B,T,H)
    H = hidden.shape[-1]

    # Only the last num_actions shifted positions are ever returned, so slice
    # BEFORE the lm_head matmul (N drops from B*(T-1) to B*num_actions).
    h_act = hidden[:, T - 1 - num_actions:T - 1, :]      # (B, A, H)
    labels_act = sequences[:, T - num_actions:]           # (B, A)

    h_flat = h_act.reshape(B * num_actions, H)
    lab_flat = labels_act.reshape(B * num_actions)

    logp = lm_head_log_probs(h_flat, params["lm_head"], lab_flat, vocab_size)
    return logp.reshape(B, num_actions)                   # action_log_probs


# ----------------------------------------------------------------------------
# Pure-JAX reference (full T-1 positions, then slice) for correctness check
# ----------------------------------------------------------------------------
def actor_forward_ref(params, sequences, attention_mask, num_actions):
    vocab_size = params["tok_emb"].shape[0]
    mask = attention_mask.astype(jnp.int32)
    position_ids = jnp.cumsum(mask, axis=-1) - 1
    position_ids = jnp.where(mask == 0, 1, position_ids)
    hidden = params["tok_emb"][sequences] + params["pos_emb"][position_ids]
    w = params["lm_head"][:, :vocab_size]                  # bf16, unpadded view
    logits = jnp.dot(hidden.astype(jnp.bfloat16), w,
                     preferred_element_type=jnp.float32)   # (B, T, V)
    shift_logits = logits[:, :-1, :]
    shift_labels = sequences[:, 1:]
    logp = jax.nn.log_softmax(shift_logits, axis=-1)
    token_logp = jnp.take_along_axis(logp, shift_labels[..., None], axis=-1)[..., 0]
    return token_logp[:, -num_actions:]


# TODO(synk): generate(), ring-attention param conversion, packed_samples paths,
# entropy / cross-entropy branches and the full HF transformer backbone have no
# clean Pallas equivalent here; only the base log-prob hot path is implemented.

if __name__ == "__main__":
    B, T, H, V = 2, 8, 32, 1024
    NUM_ACTIONS = 4

    key = jax.random.PRNGKey(0)
    k_param, k_seq = jax.random.split(key)
    params = init_params(k_param, vocab_size=V, max_pos=T, hidden=H)

    sequences = jax.random.randint(k_seq, (B, T), 0, V, dtype=jnp.int32)
    # simple left-padding-style mask (first token of row 1 masked out)
    attention_mask = jnp.ones((B, T), dtype=jnp.int32)
    attention_mask = attention_mask.at[1, 0].set(0)

    out = actor_forward(params, sequences, attention_mask, NUM_ACTIONS)
    out = jax.block_until_ready(out)

    ref = actor_forward_ref(params, sequences, attention_mask, NUM_ACTIONS)
    assert out.shape == (B, NUM_ACTIONS), out.shape
    assert jnp.allclose(out, ref, atol=1e-4, rtol=1e-4), (out, ref)

    print("KERNEL_OK")
</pallas_src>

<mosaic_0001>
module attributes {stable_mosaic.version = 11 : i64} {
  func.func @kernel(%arg0: i32, %arg1: i32, %arg2: memref<16x32xbf16, #tpu.memory_space<vmem>>, %arg3: memref<32x1024xbf16, #tpu.memory_space<vmem>>, %arg4: memref<16x1xi32, #tpu.memory_space<vmem>>, %arg5: memref<1x1024xi32, #tpu.memory_space<vmem>>, %arg6: memref<16x1xf32, #tpu.memory_space<vmem>>, %arg7: memref<16x1xf32, #tpu.memory_space<vmem>>, %arg8: memref<16x1xf32, #tpu.memory_space<vmem>>, %arg9: memref<16x1xf32, #tpu.memory_space<vmem>>) attributes {dimension_semantics = [#tpu.dimension_semantics<parallel>, #tpu.dimension_semantics<arbitrary>], iteration_bounds = array<i64: 1, 1>, scalar_prefetch = 0 : i64, scratch_operands = 3 : i64, tpu.core_type = #tpu.core_type<tc>, window_params = [{transform_indices = @transform_0, window_bounds = array<i64: 16, 32>}, {transform_indices = @transform_1, window_bounds = array<i64: 32, 1024>}, {transform_indices = @transform_2, window_bounds = array<i64: 16, 1>}, {pipeline_mode = #tpu.pipeline_mode<synchronous>, transform_indices = @transform_3, window_bounds = array<i64: 1, 1024>}, {transform_indices = @transform_4, window_bounds = array<i64: 16, 1>}]} {
    %c0_i32 = arith.constant 0 : i32
    %0 = arith.cmpi eq, %arg1, %c0_i32 : i32
    %1 = arith.extui %0 : i1 to i32
    %c0_i32_0 = arith.constant 0 : i32
    %2 = arith.cmpi ne, %1, %c0_i32_0 : i32
    scf.if %2 {
      %cst_26 = arith.constant 0xFF800000 : f32
      %40 = vector.broadcast %cst_26 : f32 to vector<16x1xf32>
      %c0_27 = arith.constant 0 : index
      %c0_28 = arith.constant 0 : index
      %41 = vector.load %arg7[%c0_27, %c0_28] : memref<16x1xf32, #tpu.memory_space<vmem>>, vector<16x1xf32>
      tpu.vector_store %arg7[%c0_27, %c0_28], %40 {strides = array<i32>} : memref<16x1xf32, #tpu.memory_space<vmem>>, vector<16x1xf32>,
      %cst_29 = arith.constant 0.000000e+00 : f32
      %42 = vector.broadcast %cst_29 : f32 to vector<16x1xf32>
      %c0_30 = arith.constant 0 : index
      %c0_31 = arith.constant 0 : index
      %43 = vector.load %arg8[%c0_30, %c0_31] : memref<16x1xf32, #tpu.memory_space<vmem>>, vector<16x1xf32>
      tpu.vector_store %arg8[%c0_30, %c0_31], %42 {strides = array<i32>} : memref<16x1xf32, #tpu.memory_space<vmem>>, vector<16x1xf32>,
      %cst_32 = arith.constant 0.000000e+00 : f32
      %44 = vector.broadcast %cst_32 : f32 to vector<16x1xf32>
      %c0_33 = arith.constant 0 : index
      %c0_34 = arith.constant 0 : index
      %45 = vector.load %arg9[%c0_33, %c0_34] : memref<16x1xf32, #tpu.memory_space<vmem>>, vector<16x1xf32>
      tpu.vector_store %arg9[%c0_33, %c0_34], %44 {strides = array<i32>} : memref<16x1xf32, #tpu.memory_space<vmem>>, vector<16x1xf32>,
    } else {
    }
    %c0 = arith.constant 0 : index
    %c0_1 = arith.constant 0 : index
    %3 = vector.load %arg2[%c0, %c0_1] : memref<16x32xbf16, #tpu.memory_space<vmem>>, vector<16x32xbf16>
    %c0_2 = arith.constant 0 : index
    %c0_3 = arith.constant 0 : index
    %4 = vector.load %arg3[%c0_2, %c0_3] : memref<32x1024xbf16, #tpu.memory_space<vmem>>, vector<32x1024xbf16>
    %cst = arith.constant dense<0.000000e+00> : vector<16x1024xf32>
    %5 = tpu.matmul %3, %4, %cst {dimension_numbers = #tpu.dot_dimension_numbers<[1], [0], [0], [1], [0, 0, 1, 1], [], []>} : vector<16x32xbf16>, vector<32x1024xbf16>, vector<16x1024xf32> -> vector<16x1024xf32>
    %c1024_i32 = arith.constant 1024 : i32
    %6 = arith.muli %arg1, %c1024_i32 : i32
    %c0_4 = arith.constant 0 : index
    %c0_5 = arith.constant 0 : index
    %7 = vector.load %arg5[%c0_4, %c0_5] : memref<1x1024xi32, #tpu.memory_space<vmem>>, vector<1x1024xi32>
    %8 = vector.broadcast %6 : i32 to vector<1x1024xi32>
    %9 = arith.addi %8, %7 : vector<1x1024xi32>
    %c0_6 = arith.constant 0 : index
    %c0_7 = arith.constant 0 : index
    %10 = vector.load %arg4[%c0_6, %c0_7] : memref<16x1xi32, #tpu.memory_space<vmem>>, vector<16x1xi32>
    %c0_8 = arith.constant 0 : index
    %c0_9 = arith.constant 0 : index
    %11 = vector.load %arg9[%c0_8, %c0_9] : memref<16x1xf32, #tpu.memory_space<vmem>>, vector<16x1xf32>
    %12 = vector.broadcast %9 : vector<1x1024xi32> to vector<16x1024xi32>
    %13 = vector.broadcast %10 : vector<16x1xi32> to vector<16x1024xi32>
    %14 = arith.cmpi eq, %12, %13 : vector<16x1024xi32>
    %cst_10 = arith.constant 0.000000e+00 : f32
    %15 = vector.broadcast %cst_10 : f32 to vector<16x1024xf32>
    %16 = arith.select %14, %5, %15 : vector<16x1024xi1>, vector<16x1024xf32>
    %cst_11 = arith.constant dense<0.000000e+00> : vector<16xf32>
    %17 = vector.multi_reduction <add>, %16, %cst_11 [1] : vector<16x1024xf32> to vector<16xf32>
    %18 = vector.shape_cast %17 : vector<16xf32> to vector<16x1xf32>
    %19 = arith.addf %11, %18 : vector<16x1xf32>
    %c0_12 = arith.constant 0 : index
    %c0_13 = arith.constant 0 : index
    %20 = vector.load %arg9[%c0_12, %c0_13] : memref<16x1xf32, #tpu.memory_space<vmem>>, vector<16x1xf32>
    tpu.vector_store %arg9[%c0_12, %c0_13], %19 {strides = array<i32>} : memref<16x1xf32, #tpu.memory_space<vmem>>, vector<16x1xf32>,
    %c0_14 = arith.constant 0 : index
    %c0_15 = arith.constant 0 : index
    %21 = vector.load %arg7[%c0_14, %c0_15] : memref<16x1xf32, #tpu.memory_space<vmem>>, vector<16x1xf32>
    %cst_16 = arith.constant dense<0xFF800000> : vector<16xf32>
    %22 = vector.multi_reduction <maximumf>, %5, %cst_16 [1] : vector<16x1024xf32> to vector<16xf32>
    %23 = vector.shape_cast %22 : vector<16xf32> to vector<16x1xf32>
    %24 = arith.maximumf %21, %23 : vector<16x1xf32>
    %25 = arith.subf %21, %24 : vector<16x1xf32>
    %26 = math.exp %25 : vector<16x1xf32>
    %c0_17 = arith.constant 0 : index
    %c0_18 = arith.constant 0 : index
    %27 = vector.load %arg8[%c0_17, %c0_18] : memref<16x1xf32, #tpu.memory_space<vmem>>, vector<16x1xf32>
    %28 = arith.mulf %26, %27 : vector<16x1xf32>
    %29 = vector.broadcast %24 : vector<16x1xf32> to vector<16x1024xf32>
    %30 = arith.subf %5, %29 : vector<16x1024xf32>
    %31 = math.exp %30 : vector<16x1024xf32>
    %cst_19 = arith.constant dense<0.000000e+00> : vector<16xf32>
    %32 = vector.multi_reduction <add>, %31, %cst_19 [1] : vector<16x1024xf32> to vector<16xf32>
    %33 = vector.shape_cast %32 : vector<16xf32> to vector<16x1xf32>
    %34 = arith.addf %28, %33 : vector<16x1xf32>
    %c0_20 = arith.constant 0 : index
    %c0_21 = arith.constant 0 : index
    %35 = vector.load %arg8[%c0_20, %c0_21] : memref<16x1xf32, #tpu.memory_space<vmem>>, vector<16x1xf32>
    tpu.vector_store %arg8[%c0_20, %c0_21], %34 {strides = array<i32>} : memref<16x1xf32, #tpu.memory_space<vmem>>, vector<16x1xf32>,
    %c0_22 = arith.constant 0 : index
    %c0_23 = arith.constant 0 : index
    %36 = vector.load %arg7[%c0_22, %c0_23] : memref<16x1xf32, #tpu.memory_space<vmem>>, vector<16x1xf32>
    tpu.vector_store %arg7[%c0_22, %c0_23], %24 {strides = array<i32>} : memref<16x1xf32, #tpu.memory_space<vmem>>, vector<16x1xf32>,
    %c0_i32_24 = arith.constant 0 : i32
    %37 = arith.cmpi eq, %arg1, %c0_i32_24 : i32
    %38 = arith.extui %37 : i1 to i32
    %c0_i32_25 = arith.constant 0 : i32
    %39 = arith.cmpi ne, %38, %c0_i32_25 : i32
    scf.if %39 {
      %c0_26 = arith.constant 0 : index
      %c0_27 = arith.constant 0 : index
      %40 = vector.load %arg9[%c0_26, %c0_27] : memref<16x1xf32, #tpu.memory_space<vmem>>, vector<16x1xf32>
      %c0_28 = arith.constant 0 : index
      %c0_29 = arith.constant 0 : index
      %41 = vector.load %arg7[%c0_28, %c0_29] : memref<16x1xf32, #tpu.memory_space<vmem>>, vector<16x1xf32>
      %c0_30 = arith.constant 0 : index
      %c0_31 = arith.constant 0 : index
      %42 = vector.load %arg8[%c0_30, %c0_31] : memref<16x1xf32, #tpu.memory_space<vmem>>, vector<16x1xf32>
      %43 = math.log %42 : vector<16x1xf32>
      %44 = arith.addf %41, %43 : vector<16x1xf32>
      %45 = arith.subf %40, %44 : vector<16x1xf32>
      %c0_32 = arith.constant 0 : index
      %c0_33 = arith.constant 0 : index
      %46 = vector.load %arg6[%c0_32, %c0_33] : memref<16x1xf32, #tpu.memory_space<vmem>>, vector<16x1xf32>
      tpu.vector_store %arg6[%c0_32, %c0_33], %45 {strides = array<i32>} : memref<16x1xf32, #tpu.memory_space<vmem>>, vector<16x1xf32>,
    } else {
    }
    return
  }
  func.func @transform_0(%arg0: i32, %arg1: i32) -> (i32, i32) {
    %c0_i32 = arith.constant 0 : i32
    %c0_i32_0 = arith.constant 0 : i32
    return %arg0, %c0_i32 : i32, i32
  }
  func.func @transform_1(%arg0: i32, %arg1: i32) -> (i32, i32) {
    %c0_i32 = arith.constant 0 : i32
    %c0_i32_0 = arith.constant 0 : i32
    return %c0_i32, %arg1 : i32, i32
  }
  func.func @transform_2(%arg0: i32, %arg1: i32) -> (i32, i32) {
    %c0_i32 = arith.constant 0 : i32
    %c0_i32_0 = arith.constant 0 : i32
    return %arg0, %c0_i32 : i32, i32
  }
  func.func @transform_3(%arg0: i32, %arg1: i32) -> (i32, i32) {
    %c0_i32 = arith.constant 0 : i32
    %c0_i32_0 = arith.constant 0 : i32
    %c0_i32_1 = arith.constant 0 : i32
    return %c0_i32, %c0_i32_0 : i32, i32
  }
  func.func @transform_4(%arg0: i32, %arg1: i32) -> (i32, i32) {
    %c0_i32 = arith.constant 0 : i32
    %c0_i32_0 = arith.constant 0 : i32
    return %arg0, %c0_i32 : i32, i32
  }
}

</mosaic_0001>

<llo_original>
// kernel: squeeze.1
$region0: #{squeeze.1}
  %s0 = inlined_call_operand.vmem [shape: f32[8], index: 0, kind: input, shape index: {}]
  %s1 = inlined_call_operand.hbm [shape: f32[2,4], index: 1, kind: output, shape index: {}]
  $region1: #{squeeze.1} parent=0
    #allocation0 [shape = 'u8[1024]{0}', space=vmem, size = 0x400, scoped, tag = 'operand span for operand 1']
    #allocation1 [shape = 's32[1]{0}', space=sflag, size = 0x4, scoped, tag = 'scoped memory for squeeze.1']
    #allocation2 [shape = 'u8[4096]{0}', space=vmem, size = 0x1000, scoped, tag = 'scoped mem for output reshape']
    #allocation3 [shape = 'u8[4096]{0}', space=vmem, size = 0x1000, scoped, tag = 'scoped mem for input reshape']
    %2 = vsyncpa [#allocation1], 0
    %s4 = sshllo.u32 0, 1
    %v5 = vld [vmem:[%s0] sm:%s4]
    %6 = vst [vmem:[#allocation3] sm:%s4] %v5
    %v7 = vld [vmem:[#allocation3] sm:$0x1]
    %vm8 = vcmask 31744
    %9 = vst.msk [vmem:[#allocation2] sm:$0x1] %vm8, %v7
    %v10 = vld [vmem:[#allocation3] sm:$0x1]
    %11 = vrot.lane.b32.xlu0 %v10, 124
    %v12 = vpop.permute.xlu0 %11
    %vm13 = vcmask 31744
    %s14 = scalar_lea.vmem [#allocation2], 1
    %15 = vst.msk [vmem:[%s14] sm:$0x1] %vm13, %v12
    %s17 = sshllo.u32 0, 2
    %v19 = vld [vmem:[#allocation2] sm:%s17]
    %s20 = sshllo.u32 0, 2
    %21 = vst [vmem:[#allocation0] sm:%s20] %v19
    %s23 = ssub.s32 32, 32
    %24 = vsyncadd [#allocation1], %s23
    %s26 = sshll.u32 [#allocation0], 4
    %s27 = int_to_ptr.vmem [resolvable:$true] %s26
    %29 = dma.vmem_to_hbm [thread:$0]  %s27, 32, %s1, [#allocation1]
    %30 = dma.done [#allocation1], 32
    %31 = vsyncpa [#allocation1], 1

// kernel: actor_forward.1
$region0: #{actor_forward.1}
  #allocation0 [shape = 'u32[]', space=smem, size = 0x4, offset = 0x4, fixed_abs, tag = 'smem constant byte address 0x4 - core index']
  #allocation1 [shape = 'u32[144,128]{1,0:T(1,128)}', space=vmem, size = 0x12000, scoped, tag = 'internal scratch']
  #allocation2 [shape = 'f32[16,1]{1,0:T(8,128)}', space=vmem, size = 0x2000, scoped, tag = 'scratch operand']
  #allocation3 [shape = 'f32[16,1]{1,0:T(8,128)}', space=vmem, size = 0x2000, scoped, tag = 'scratch operand']
  #allocation4 [shape = 'f32[16,1]{1,0:T(8,128)}', space=vmem, size = 0x2000, scoped, tag = 'scratch operand']
  %s0 = inlined_call_operand.vmem [shape: bf16[16,32], index: 0, kind: input, shape index: {}]
  %s1 = inlined_call_operand.vmem [shape: bf16[32,1024], index: 1, kind: input, shape index: {}]
  %s2 = inlined_call_operand.vmem [shape: s32[16,1], index: 2, kind: input, shape index: {}]
  %s3 = inlined_call_operand.vmem [shape: s32[1,1024], index: 3, kind: input, shape index: {}]
  %s4 = inlined_call_operand.vmem [shape: f32[16,1], index: 4, kind: output, shape index: {}]
  %s5 = sld [smem:[#allocation0]]
  $region34: #{actor_forward.1} parent=0
    _
  %s7 = ssub.s32 1, %s5
  %s8 = scalar_select 0, %s7, %s5
  // Predicated region
  $region2: #{actor_forward.1} parent=0 // pred_check
    _
  $region3: #{actor_forward.1} parent=0 // pred_check_branch
    %10 = sbr.rel (0) target = $region5
  $region4: #{actor_forward.1} parent=0 // pred_region
    _
  $region5: #{actor_forward.1} parent=0 // pred_fallthru
    _
  // Predicated region
  $region6: #{actor_forward.1} parent=0 // pred_check
    _
  $region7: #{actor_forward.1} parent=0 // pred_check_branch
    %12 = sbr.rel (0) target = $region9
  $region8: #{actor_forward.1} parent=0 // pred_region
    _
  $region9: #{actor_forward.1} parent=0 // pred_fallthru
    _
  // Predicated region
  $region10: #{actor_forward.1} parent=0 // pred_check
    _
  $region11: #{actor_forward.1} parent=0 // pred_check_branch
    %14 = sbr.rel (0) target = $region13
  $region12: #{actor_forward.1} parent=0 // pred_region
    _
  $region13: #{actor_forward.1} parent=0 // pred_fallthru
    _
  // Predicated region
  $region14: #{actor_forward.1} parent=0 // pred_check
    _
  $region15: #{actor_forward.1} parent=0 // pred_check_branch
    %16 = sbr.rel (0) target = $region17
  $region16: #{actor_forward.1} parent=0 // pred_region
    _
  $region17: #{actor_forward.1} parent=0 // pred_fallthru
    _
  %p18 = scmp.eq.s32.totalorder 0, 0
  // Predicated region
  $region18: #{actor_forward.1} parent=0 // pred_check
    %p19 = pneg %p18
  $region19: #{actor_forward.1} parent=0 // pred_check_branch
    %21 = sbr.rel (%p19) target = $region21
  $region20: #{actor_forward.1} parent=0 // pred_region
    %vm22 = vcmask 7168
    %23 = vst.msk [vmem:[#allocation2] sm:$0xff] %vm22, -inf
    %24 = vst.msk [vmem:[#allocation2 + $0x8] sm:$0xff] %vm22, -inf
    %25 = vst.msk [vmem:[#allocation3] sm:$0xff] %vm22, 0.0
    %26 = vst.msk [vmem:[#allocation3 + $0x8] sm:$0xff] %vm22, 0.0
    %27 = vst.msk [vmem:[#allocation4] sm:$0xff] %vm22, 0.0
    %28 = vst.msk [vmem:[#allocation4 + $0x8] sm:$0xff] %vm22, 0.0
  $region21: #{actor_forward.1} parent=0 // pred_fallthru
    _
  %v29 = vld [vmem:[%s0] sm:$0xf]
  %v30 = vld [vmem:[%s0 + $0x4] sm:$0xf]
  %v31 = vld [vmem:[%s1] sm:$0xff]
  %v32 = vld [vmem:[%s1 + $0x8] sm:$0xff]
  %v33 = vld [vmem:[%s1 + $0x10] sm:$0xff]
  %v34 = vld [vmem:[%s1 + $0x18] sm:$0xff]
  %v35 = vld [vmem:[%s1 + $0x20] sm:$0xff]
  %v36 = vld [vmem:[%s1 + $0x28] sm:$0xff]
  %v37 = vld [vmem:[%s1 + $0x30] sm:$0xff]
  %v38 = vld [vmem:[%s1 + $0x38] sm:$0xff]
  %v39 = vld [vmem:[%s1 + $0x40] sm:$0xff]
  %v40 = vld [vmem:[%s1 + $0x48] sm:$0xff]
  %v41 = vld [vmem:[%s1 + $0x50] sm:$0xff]
  %v42 = vld [vmem:[%s1 + $0x58] sm:$0xff]
  %v43 = vld [vmem:[%s1 + $0x60] sm:$0xff]
  %v44 = vld [vmem:[%s1 + $0x68] sm:$0xff]
  %v45 = vld [vmem:[%s1 + $0x70] sm:$0xff]
  %v46 = vld [vmem:[%s1 + $0x78] sm:$0xff]
  %v49 = vunpack.c.l.b16 %v29
  %v50 = vunpack.c.l.b16 %v30
  %v51 = vpack.c.b16 %v50, %v49
  %v68 = vunpack.c.l.b16 %v31
  %v69 = vunpack.c.h.b16 %v31
  %v70 = vunpack.c.l.b16 %v32
  %v71 = vunpack.c.h.b16 %v32
  %v72 = vunpack.c.l.b16 %v33
  %v73 = vunpack.c.h.b16 %v33
  %v74 = vunpack.c.l.b16 %v34
  %v75 = vunpack.c.h.b16 %v34
  %v76 = vunpack.c.l.b16 %v35
  %v77 = vunpack.c.h.b16 %v35
  %v78 = vunpack.c.l.b16 %v36
  %v79 = vunpack.c.h.b16 %v36
  %v80 = vunpack.c.l.b16 %v37
  %v81 = vunpack.c.h.b16 %v37
  %v82 = vunpack.c.l.b16 %v38
  %v83 = vunpack.c.h.b16 %v38
  %v84 = vunpack.c.l.b16 %v39
  %v85 = vunpack.c.h.b16 %v39
  %v86 = vunpack.c.l.b16 %v40
  %v87 = vunpack.c.h.b16 %v40
  %v88 = vunpack.c.l.b16 %v41
  %v89 = vunpack.c.h.b16 %v41
  %v90 = vunpack.c.l.b16 %v42
  %v91 = vunpack.c.h.b16 %v42
  %v92 = vunpack.c.l.b16 %v43
  %v93 = vunpack.c.h.b16 %v43
  %v94 = vunpack.c.l.b16 %v44
  %v95 = vunpack.c.h.b16 %v44
  %v96 = vunpack.c.l.b16 %v45
  %v97 = vunpack.c.h.b16 %v45
  %v98 = vunpack.c.l.b16 %v46
  %v99 = vunpack.c.h.b16 %v46
  %v100 = vpack.c.b16 %v76, %v68
  %v101 = vpack.c.b16 %v77, %v69
  %v102 = vpack.c.b16 %v78, %v70
  %v103 = vpack.c.b16 %v79, %v71
  %v104 = vpack.c.b16 %v80, %v72
  %v105 = vpack.c.b16 %v81, %v73
  %v106 = vpack.c.b16 %v82, %v74
  %v107 = vpack.c.b16 %v83, %v75
  %v108 = vpack.c.b16 %v92, %v84
  %v109 = vpack.c.b16 %v93, %v85
  %v110 = vpack.c.b16 %v94, %v86
  %v111 = vpack.c.b16 %v95, %v87
  %v112 = vpack.c.b16 %v96, %v88
  %v113 = vpack.c.b16 %v97, %v89
  %v114 = vpack.c.b16 %v98, %v90
  %v115 = vpack.c.b16 %v99, %v91
  %vm132 = vcmask 261120
  %v134 = vsel %vm132, %v51, 0
  %136 = vmatprep.subr.bf16.mxu0 %v101
  %137 = vmatpush1.bf16.msra.mxu0 %v100
  %138 = vmatprep.subr.bf16.mxu0 %v109
  %139 = vmatpush1.bf16.msra.mxu0 %v108
  %140 = vmatprep.subr.bf16.mxu0 0
  %141 = vmatpush1.bf16.msra.mxu0 0
  %142 = vmatprep.subr.bf16.mxu0 0
  %143 = vmatpush1.bf16.msra.mxu0 0
  %144 = vmatprep.subr.bf16.mxu0 0
  %145 = vmatpush1.bf16.msra.mxu0 0
  %146 = vmatprep.subr.bf16.mxu0 0
  %147 = vmatpush1.bf16.msra.mxu0 0
  %148 = vmatprep.subr.bf16.mxu0 0
  %149 = vmatpush1.bf16.msra.mxu0 0
  %150 = vmatprep.subr.bf16.mxu0 0
  %151 = vmatpush1.bf16.msra.mxu0 0
  %152 = vmatprep.subr.bf16.mxu0 0
  %153 = vmatpush1.bf16.msra.mxu0 0
  %154 = vmatprep.subr.bf16.mxu0 0
  %155 = vmatpush1.bf16.msra.mxu0 0
  %156 = vmatprep.subr.bf16.mxu0 0
  %157 = vmatpush1.bf16.msra.mxu0 0
  %158 = vmatprep.subr.bf16.mxu0 0
  %159 = vmatpush1.bf16.msra.mxu0 0
  %160 = vmatprep.subr.bf16.mxu0 0
  %161 = vmatpush1.bf16.msra.mxu0 0
  %162 = vmatprep.subr.bf16.mxu0 0
  %163 = vmatpush1.bf16.msra.mxu0 0
  %164 = vmatprep.subr.bf16.mxu0 0
  %165 = vmatpush1.bf16.msra.mxu0 0
  %166 = vmatprep.subr.bf16.mxu0 0
  %167 = vmatpush1.bf16.msra.mxu0 0
  %168 = vmatprep.mubr.bf16.mxu0 0
  %169 = vmatmul.mubr.bf16.gmra.mrb[0].mxu0 %v134
  %v170 = vpop.f32.mrb[0].mxu0
  %v171 = vadd.f32 0.0, %v170
  %v172 = vpop.f32.mrb[0].mxu0
  %v173 = vadd.f32 0.0, %v172
  %v174 = vpop.f32.mrb[0].mxu0
  %v175 = vadd.f32 0.0, %v174
  %v176 = vpop.f32.mrb[0].mxu0
  %v177 = vadd.f32 0.0, %v176
  %178 = vdwg.mxu0
  %179 = vmatprep.subr.bf16.mxu0 %v103
  %180 = vmatpush1.bf16.msra.mxu0 %v102
  %181 = vmatprep.subr.bf16.mxu0 %v111
  %182 = vmatpush1.bf16.msra.mxu0 %v110
  %183 = vmatprep.subr.bf16.mxu0 0
  %184 = vmatpush1.bf16.msra.mxu0 0
  %185 = vmatprep.subr.bf16.mxu0 0
  %186 = vmatpush1.bf16.msra.mxu0 0
  %187 = vmatprep.subr.bf16.mxu0 0
  %188 = vmatpush1.bf16.msra.mxu0 0
  %189 = vmatprep.subr.bf16.mxu0 0
  %190 = vmatpush1.bf16.msra.mxu0 0
  %191 = vmatprep.subr.bf16.mxu0 0
  %192 = vmatpush1.bf16.msra.mxu0 0
  %193 = vmatprep.subr.bf16.mxu0 0
  %194 = vmatpush1.bf16.msra.mxu0 0
  %195 = vmatprep.subr.bf16.mxu0 0
  %196 = vmatpush1.bf16.msra.mxu0 0
  %197 = vmatprep.subr.bf16.mxu0 0
  %198 = vmatpush1.bf16.msra.mxu0 0
  %199 = vmatprep.subr.bf16.mxu0 0
  %200 = vmatpush1.bf16.msra.mxu0 0
  %201 = vmatprep.subr.bf16.mxu0 0
  %202 = vmatpush1.bf16.msra.mxu0 0
  %203 = vmatprep.subr.bf16.mxu0 0
  %204 = vmatpush1.bf16.msra.mxu0 0
  %205 = vmatprep.subr.bf16.mxu0 0
  %206 = vmatpush1.bf16.msra.mxu0 0
  %207 = vmatprep.subr.bf16.mxu0 0
  %208 = vmatpush1.bf16.msra.mxu0 0
  %209 = vmatprep.subr.bf16.mxu0 0
  %210 = vmatpush1.bf16.msra.mxu0 0
  %211 = vmatprep.mubr.bf16.mxu0 0
  %212 = vmatmul.mubr.bf16.gmra.mrb[0].mxu0 %v134
  %v213 = vpop.f32.mrb[0].mxu0
  %v214 = vadd.f32 0.0, %v213
  %v215 = vpop.f32.mrb[0].mxu0
  %v216 = vadd.f32 0.0, %v215
  %v217 = vpop.f32.mrb[0].mxu0
  %v218 = vadd.f32 0.0, %v217
  %v219 = vpop.f32.mrb[0].mxu0
  %v220 = vadd.f32 0.0, %v219
  %221 = vdwg.mxu0
  %222 = vmatprep.subr.bf16.mxu0 %v105
  %223 = vmatpush1.bf16.msra.mxu0 %v104
  %224 = vmatprep.subr.bf16.mxu0 %v113
  %225 = vmatpush1.bf16.msra.mxu0 %v112
  %226 = vmatprep.subr.bf16.mxu0 0
  %227 = vmatpush1.bf16.msra.mxu0 0
  %228 = vmatprep.subr.bf16.mxu0 0
  %229 = vmatpush1.bf16.msra.mxu0 0
  %230 = vmatprep.subr.bf16.mxu0 0
  %231 = vmatpush1.bf16.msra.mxu0 0
  %232 = vmatprep.subr.bf16.mxu0 0
  %233 = vmatpush1.bf16.msra.mxu0 0
  %234 = vmatprep.subr.bf16.mxu0 0
  %235 = vmatpush1.bf16.msra.mxu0 0
  %236 = vmatprep.subr.bf16.mxu0 0
  %237 = vmatpush1.bf16.msra.mxu0 0
  %238 = vmatprep.subr.bf16.mxu0 0
  %239 = vmatpush1.bf16.msra.mxu0 0
  %240 = vmatprep.subr.bf16.mxu0 0
  %241 = vmatpush1.bf16.msra.mxu0 0
  %242 = vmatprep.subr.bf16.mxu0 0
  %243 = vmatpush1.bf16.msra.mxu0 0
  %244 = vmatprep.subr.bf16.mxu0 0
  %245 = vmatpush1.bf16.msra.mxu0 0
  %246 = vmatprep.subr.bf16.mxu0 0
  %247 = vmatpush1.bf16.msra.mxu0 0
  %248 = vmatprep.subr.bf16.mxu0 0
  %249 = vmatpush1.bf16.msra.mxu0 0
  %250 = vmatprep.subr.bf16.mxu0 0
  %251 = vmatpush1.bf16.msra.mxu0 0
  %252 = vmatprep.subr.bf16.mxu0 0
  %253 = vmatpush1.bf16.msra.mxu0 0
  %254 = vmatprep.mubr.bf16.mxu0 0
  %255 = vmatmul.mubr.bf16.gmra.mrb[0].mxu0 %v134
  %v256 = vpop.f32.mrb[0].mxu0
  %v257 = vadd.f32 0.0, %v256
  %v258 = vpop.f32.mrb[0].mxu0
  %v259 = vadd.f32 0.0, %v258
  %v260 = vpop.f32.mrb[0].mxu0
  %v261 = vadd.f32 0.0, %v260
  %v262 = vpop.f32.mrb[0].mxu0
  %v263 = vadd.f32 0.0, %v262
  %264 = vdwg.mxu0
  %265 = vmatprep.subr.bf16.mxu0 %v107
  %266 = vmatpush1.bf16.msra.mxu0 %v106
  %267 = vmatprep.subr.bf16.mxu0 %v115
  %268 = vmatpush1.bf16.msra.mxu0 %v114
  %269 = vmatprep.subr.bf16.mxu0 0
  %270 = vmatpush1.bf16.msra.mxu0 0
  %271 = vmatprep.subr.bf16.mxu0 0
  %272 = vmatpush1.bf16.msra.mxu0 0
  %273 = vmatprep.subr.bf16.mxu0 0
  %274 = vmatpush1.bf16.msra.mxu0 0
  %275 = vmatprep.subr.bf16.mxu0 0
  %276 = vmatpush1.bf16.msra.mxu0 0
  %277 = vmatprep.subr.bf16.mxu0 0
  %278 = vmatpush1.bf16.msra.mxu0 0
  %279 = vmatprep.subr.bf16.mxu0 0
  %280 = vmatpush1.bf16.msra.mxu0 0
  %281 = vmatprep.subr.bf16.mxu0 0
  %282 = vmatpush1.bf16.msra.mxu0 0
  %283 = vmatprep.subr.bf16.mxu0 0
  %284 = vmatpush1.bf16.msra.mxu0 0
  %285 = vmatprep.subr.bf16.mxu0 0
  %286 = vmatpush1.bf16.msra.mxu0 0
  %287 = vmatprep.subr.bf16.mxu0 0
  %288 = vmatpush1.bf16.msra.mxu0 0
  %289 = vmatprep.subr.bf16.mxu0 0
  %290 = vmatpush1.bf16.msra.mxu0 0
  %291 = vmatprep.subr.bf16.mxu0 0
  %292 = vmatpush1.bf16.msra.mxu0 0
  %293 = vmatprep.subr.bf16.mxu0 0
  %294 = vmatpush1.bf16.msra.mxu0 0
  %295 = vmatprep.subr.bf16.mxu0 0
  %296 = vmatpush1.bf16.msra.mxu0 0
  %297 = vmatprep.mubr.bf16.mxu0 0
  %298 = vmatmul.mubr.bf16.gmra.mrb[0].mxu0 %v134
  %v299 = vpop.f32.mrb[0].mxu0
  %v300 = vadd.f32 0.0, %v299
  %v301 = vpop.f32.mrb[0].mxu0
  %v302 = vadd.f32 0.0, %v301
  %v303 = vpop.f32.mrb[0].mxu0
  %v304 = vadd.f32 0.0, %v303
  %v305 = vpop.f32.mrb[0].mxu0
  %v306 = vadd.f32 0.0, %v305
  %307 = vdwg.mxu0
  %s308 = smul.u32 0, 1024
  %v309 = vld [vmem:[%s3] sm:$0xff]
  %v310 = vstv %s308
  %v311 = vadd.s32 %v310, %v309
  %v312 = vld [vmem:[%s2] sm:$0xff]
  %v313 = vld [vmem:[%s2 + $0x8] sm:$0xff]
  %v314 = vld [vmem:[#allocation4] sm:$0xff]
  %v315 = vld [vmem:[#allocation4 + $0x8] sm:$0xff]
  %v316 = vlaneseq
  %v317 = vshrl.u32 %v316, 7
  %v318 = vsub.s32 0, %v317
  %v319 = vrot.slane %v311, %v318
  %v320 = vlaneseq
  %v321 = vshrl.u32 %v320, 7
  %v322 = vsub.s32 1, %v321
  %v323 = vrot.slane %v311, %v322
  %v324 = vlaneseq
  %v325 = vshrl.u32 %v324, 7
  %v326 = vsub.s32 2, %v325
  %v327 = vrot.slane %v311, %v326
  %v328 = vlaneseq
  %v329 = vshrl.u32 %v328, 7
  %v330 = vsub.s32 3, %v329
  %v331 = vrot.slane %v311, %v330
  %v332 = vlaneseq
  %v333 = vshrl.u32 %v332, 7
  %v334 = vsub.s32 4, %v333
  %v335 = vrot.slane %v311, %v334
  %v336 = vlaneseq
  %v337 = vshrl.u32 %v336, 7
  %v338 = vsub.s32 5, %v337
  %v339 = vrot.slane %v311, %v338
  %v340 = vlaneseq
  %v341 = vshrl.u32 %v340, 7
  %v342 = vsub.s32 6, %v341
  %v343 = vrot.slane %v311, %v342
  %v344 = vlaneseq
  %v345 = vshrl.u32 %v344, 7
  %v346 = vsub.s32 7, %v345
  %v347 = vrot.slane %v311, %v346
  %348 = vset.pattern.permute.xlu0 0
  %349 = vperm.xlu0 %348, %v312
  %v350 = vpop.permute.xlu0 %349
  %351 = vset.pattern.permute.xlu0 0
  %352 = vperm.xlu0 %351, %v313
  %v353 = vpop.permute.xlu0 %352
  %vm354 = vcmp.eq.s32.totalorder %v319, %v350
  %vm355 = vcmp.eq.s32.totalorder %v323, %v350
  %vm356 = vcmp.eq.s32.totalorder %v327, %v350
  %vm357 = vcmp.eq.s32.totalorder %v331, %v350
  %vm358 = vcmp.eq.s32.totalorder %v335, %v350
  %vm359 = vcmp.eq.s32.totalorder %v339, %v350
  %vm360 = vcmp.eq.s32.totalorder %v343, %v350
  %vm361 = vcmp.eq.s32.totalorder %v347, %v350
  %vm362 = vcmp.eq.s32.totalorder %v319, %v353
  %vm363 = vcmp.eq.s32.totalorder %v323, %v353
  %vm364 = vcmp.eq.s32.totalorder %v327, %v353
  %vm365 = vcmp.eq.s32.totalorder %v331, %v353
  %vm366 = vcmp.eq.s32.totalorder %v335, %v353
  %vm367 = vcmp.eq.s32.totalorder %v339, %v353
  %vm368 = vcmp.eq.s32.totalorder %v343, %v353
  %vm369 = vcmp.eq.s32.totalorder %v347, %v353
  %v370 = vsel %vm354, %v171, 0.0
  %v371 = vsel %vm355, %v173, 0.0
  %v372 = vsel %vm356, %v214, 0.0
  %v373 = vsel %vm357, %v216, 0.0
  %v374 = vsel %vm358, %v257, 0.0
  %v375 = vsel %vm359, %v259, 0.0
  %v376 = vsel %vm360, %v300, 0.0
  %v377 = vsel %vm361, %v302, 0.0
  %v378 = vsel %vm362, %v175, 0.0
  %v379 = vsel %vm363, %v177, 0.0
  %v380 = vsel %vm364, %v218, 0.0
  %v381 = vsel %vm365, %v220, 0.0
  %v382 = vsel %vm366, %v261, 0.0
  %v383 = vsel %vm367, %v263, 0.0
  %v384 = vsel %vm368, %v304, 0.0
  %v385 = vsel %vm369, %v306, 0.0
  %v386 = vadd.f32 %v370, %v371
  %v387 = vadd.f32 %v386, %v372
  %v388 = vadd.f32 %v387, %v373
  %v389 = vadd.f32 %v388, %v374
  %v390 = vadd.f32 %v389, %v375
  %v391 = vadd.f32 %v390, %v376
  %v392 = vadd.f32 %v391, %v377
  %393 = vadd.xlane.f32.xlu0 %v392
  %v394 = vpop.xlane.xlu0 %393
  %v395 = vadd.f32 %v378, %v379
  %v396 = vadd.f32 %v395, %v380
  %v397 = vadd.f32 %v396, %v381
  %v398 = vadd.f32 %v397, %v382
  %v399 = vadd.f32 %v398, %v383
  %v400 = vadd.f32 %v399, %v384
  %v401 = vadd.f32 %v400, %v385
  %402 = vadd.xlane.f32.xlu0 %v401
  %v403 = vpop.xlane.xlu0 %402
  %v404 = vadd.f32 %v314, %v394
  %v405 = vadd.f32 %v315, %v403
  %vm406 = vcmask 7168
  %407 = vst.msk [vmem:[#allocation4] sm:$0xff] %vm406, %v404
  %408 = vst.msk [vmem:[#allocation4 + $0x8] sm:$0xff] %vm406, %v405
  %v409 = vld [vmem:[#allocation2] sm:$0xff]
  %v410 = vld [vmem:[#allocation2 + $0x8] sm:$0xff]
  %v411 = vmax.f32 %v171, %v214
  %v412 = vmax.f32 %v173, %v216
  %v413 = vmax.f32 %v411, %v257
  %v414 = vmax.f32 %v412, %v259
  %v415 = vmax.f32 %v413, %v300
  %v416 = vmax.f32 %v414, %v302
  %v417 = vmax.f32 %v415, %v416
  %418 = vmax.xlane.f32.xlu0 %v417
  %v419 = vpop.xlane.xlu0 %418
  %v420 = vmax.f32 %v175, %v218
  %v421 = vmax.f32 %v177, %v220
  %v422 = vmax.f32 %v420, %v261
  %v423 = vmax.f32 %v421, %v263
  %v424 = vmax.f32 %v422, %v304
  %v425 = vmax.f32 %v423, %v306
  %v426 = vmax.f32 %v424, %v425
  %427 = vmax.xlane.f32.xlu0 %v426
  %v428 = vpop.xlane.xlu0 %427
  %v429 = vmax.f32 %v409, %v419
  %v430 = vmax.f32 %v410, %v428
  %v431 = vsub.f32 %v409, %v429
  %v432 = vsub.f32 %v410, %v430
  %v433 = vmul.f32 %v431, 1.442695
  %v434 = vpow.pop %v433
  %v435 = vmul.f32 %v432, 1.442695
  %v436 = vpow.pop %v435
  %v437 = vld [vmem:[#allocation3] sm:$0xff]
  %v438 = vld [vmem:[#allocation3 + $0x8] sm:$0xff]
  %v439 = vmul.f32 %v434, %v437
  %v440 = vmul.f32 %v436, %v438
  %442 = vset.pattern.permute.xlu0 0
  %443 = vperm.xlu0 %442, %v429
  %v444 = vpop.permute.xlu0 %443
  %447 = vset.pattern.permute.xlu0 0
  %448 = vperm.xlu0 %447, %v430
  %v449 = vpop.permute.xlu0 %448
  %v451 = vsub.f32 %v171, %v444
  %v452 = vsub.f32 %v173, %v444
  %v453 = vsub.f32 %v214, %v444
  %v454 = vsub.f32 %v216, %v444
  %v455 = vsub.f32 %v257, %v444
  %v456 = vsub.f32 %v259, %v444
  %v457 = vsub.f32 %v300, %v444
  %v458 = vsub.f32 %v302, %v444
  %v459 = vsub.f32 %v175, %v449
  %v460 = vsub.f32 %v177, %v449
  %v461 = vsub.f32 %v218, %v449
  %v462 = vsub.f32 %v220, %v449
  %v463 = vsub.f32 %v261, %v449
  %v464 = vsub.f32 %v263, %v449
  %v465 = vsub.f32 %v304, %v449
  %v466 = vsub.f32 %v306, %v449
  %v467 = vmul.f32 %v451, 1.442695
  %v468 = vpow.pop %v467
  %v469 = vmul.f32 %v452, 1.442695
  %v470 = vpow.pop %v469
  %v471 = vmul.f32 %v453, 1.442695
  %v472 = vpow.pop %v471
  %v473 = vmul.f32 %v454, 1.442695
  %v474 = vpow.pop %v473
  %v475 = vmul.f32 %v455, 1.442695
  %v476 = vpow.pop %v475
  %v477 = vmul.f32 %v456, 1.442695
  %v478 = vpow.pop %v477
  %v479 = vmul.f32 %v457, 1.442695
  %v480 = vpow.pop %v479
  %v481 = vmul.f32 %v458, 1.442695
  %v482 = vpow.pop %v481
  %v483 = vmul.f32 %v459, 1.442695
  %v484 = vpow.pop %v483
  %v485 = vmul.f32 %v460, 1.442695
  %v486 = vpow.pop %v485
  %v487 = vmul.f32 %v461, 1.442695
  %v488 = vpow.pop %v487
  %v489 = vmul.f32 %v462, 1.442695
  %v490 = vpow.pop %v489
  %v491 = vmul.f32 %v463, 1.442695
  %v492 = vpow.pop %v491
  %v493 = vmul.f32 %v464, 1.442695
  %v494 = vpow.pop %v493
  %v495 = vmul.f32 %v465, 1.442695
  %v496 = vpow.pop %v495
  %v497 = vmul.f32 %v466, 1.442695
  %v498 = vpow.pop %v497
  %v499 = vadd.f32 %v468, %v470
  %v500 = vadd.f32 %v499, %v472
  %v501 = vadd.f32 %v500, %v474
  %v502 = vadd.f32 %v501, %v476
  %v503 = vadd.f32 %v502, %v478
  %v504 = vadd.f32 %v503, %v480
  %v505 = vadd.f32 %v504, %v482
  %506 = vadd.xlane.f32.xlu0 %v505
  %v507 = vpop.xlane.xlu0 %506
  %v508 = vadd.f32 %v484, %v486
  %v509 = vadd.f32 %v508, %v488
  %v510 = vadd.f32 %v509, %v490
  %v511 = vadd.f32 %v510, %v492
  %v512 = vadd.f32 %v511, %v494
  %v513 = vadd.f32 %v512, %v496
  %v514 = vadd.f32 %v513, %v498
  %515 = vadd.xlane.f32.xlu0 %v514
  %v516 = vpop.xlane.xlu0 %515
  %v517 = vadd.f32 %v439, %v507
  %v518 = vadd.f32 %v440, %v516
  %519 = vst.msk [vmem:[#allocation3] sm:$0xff] %vm406, %v517
  %520 = vst.msk [vmem:[#allocation3 + $0x8] sm:$0xff] %vm406, %v518
  %521 = vst.msk [vmem:[#allocation2] sm:$0xff] %vm406, %v429
  %522 = vst.msk [vmem:[#allocation2 + $0x8] sm:$0xff] %vm406, %v430
  // Predicated region
  $region22: #{actor_forward.1} parent=0 // pred_check
    %p523 = pneg %p18
  $region23: #{actor_forward.1} parent=0 // pred_check_branch
    %525 = sbr.rel (%p523) target = $region25
  $region24: #{actor_forward.1} parent=0 // pred_region
    %v526 = vld [vmem:[#allocation4] sm:$0xff]
    %v527 = vld [vmem:[#allocation4 + $0x8] sm:$0xff]
    %v528 = vld [vmem:[#allocation2] sm:$0xff]
    %v529 = vld [vmem:[#allocation2 + $0x8] sm:$0xff]
    %v530 = vld [vmem:[#allocation3] sm:$0xff]
    %v531 = vld [vmem:[#allocation3 + $0x8] sm:$0xff]
    %v532 = vlog2.pop %v530
    %v533 = vmul.f32 %v532, 0.6931472
    %v534 = vlog2.pop %v531
    %v535 = vmul.f32 %v534, 0.6931472
    %v536 = vadd.f32 %v528, %v533
    %v537 = vadd.f32 %v529, %v535
    %v538 = vsub.f32 %v526, %v536
    %v539 = vsub.f32 %v527, %v537
    %540 = vst.msk [vmem:[%s4] sm:$0xff] %vm406, %v538
    %541 = vst.msk [vmem:[%s4 + $0x8] sm:$0xff] %vm406, %v539
  $region25: #{actor_forward.1} parent=0 // pred_fallthru
    _
  // Predicated region
  $region26: #{actor_forward.1} parent=0 // pred_check
    _
  $region27: #{actor_forward.1} parent=0 // pred_check_branch
    %543 = sbr.rel (0) target = $region29
  $region28: #{actor_forward.1} parent=0 // pred_region
    _
  $region29: #{actor_forward.1} parent=0 // pred_fallthru
    _
  // Predicated region
  $region30: #{actor_forward.1} parent=0 // pred_check
    _
  $region31: #{actor_forward.1} parent=0 // pred_check_branch
    %545 = sbr.rel (0) target = $region33
  $region32: #{actor_forward.1} parent=0 // pred_region
    _
  $region33: #{actor_forward.1} parent=0 // pred_fallthru
    _

</llo_original>
